<compile_context>
chip_gen: v7x
topology: tpu7x:2x2x1
jax: 0.10.0
libtpu: 0.0.40
codegen_flags: <defaults>
</compile_context>

<pallas_src>
import functools

import jax
import jax.numpy as jnp
from jax.experimental import pallas as pl
from jax.experimental.pallas import tpu as pltpu


# ----------------------------------------------------------------------------
# Shared helpers
# ----------------------------------------------------------------------------

_DEFAULT_VMEM_CAPACITY = 64 * 1024 * 1024  # conservative: v7x per-TensorCore VMEM


def _vmem_capacity_bytes():
    try:
        cap = int(getattr(pltpu.get_tpu_info(), "vmem_capacity_bytes", 0))
        if cap > 0:
            return cap
    except Exception:
        pass
    return _DEFAULT_VMEM_CAPACITY


def _sublane_align(dtype):
    # sub-32-bit dtypes pack along sublanes
    return {4: 8, 2: 16, 1: 32}.get(jnp.dtype(dtype).itemsize, 8)


def _round_up(x, m):
    return ((x + m - 1) // m) * m


def _pool_geometry(L, k):
    """Padding / output geometry exactly as in the PyTorch module."""
    stride = 1  # only used for the SAME-padding computation, as in the module
    out_dim = (L + stride - 1) // stride
    p = max(0, (out_dim - 1) * stride + k - L)
    pad_left = p // 2
    pad_right = p - pad_left
    L_out = (L + p - k) // k + 1  # nn.MaxPool1d default stride == kernel_size
    return p, pad_left, pad_right, L_out


def _reference(x, kernel_size: int):
    """Pure-JAX reference reproducing the PyTorch module, for verification."""
    N, C, L = x.shape
    k = int(kernel_size)
    _, pad_left, pad_right, L_out = _pool_geometry(L, k)
    xp = jnp.pad(x, ((0, 0), (0, 0), (pad_left, pad_right)), constant_values=0)
    xp = xp[..., : L_out * k]
    return jnp.max(xp.reshape(N, C, L_out, k), axis=-1)


# ----------------------------------------------------------------------------
# Preferred path: no XLA pre-pass, in-kernel pad + lane-strided de-interleave
# ----------------------------------------------------------------------------

def _direct_kernel(x_ref, o_ref, pad_ref, *, k, pad_left, L_used, Lp, L_out):
    # x_ref: (TR, L) raw input rows.  pad_ref: (TR, Lp) scratch holding the
    # zero-padded, trailing-trimmed row.  o_ref: (TR, L_out) lane-dense output.
    TR = pad_ref.shape[0]
    if pad_left > 0:
        pad_ref[:, pl.ds(0, pad_left)] = jnp.zeros((TR, pad_left), pad_ref.dtype)
    tail = pad_left + L_used
    if tail < Lp:
        pad_ref[:, pl.ds(tail, Lp - tail)] = jnp.zeros((TR, Lp - tail), pad_ref.dtype)
    # Place the real samples at their padded positions (one VMEM-resident copy;
    # hidden under the HBM DMA of the next/previous block).
    pad_ref[:, pl.ds(pad_left, L_used)] = x_ref[:, pl.ds(0, L_used)]
    # k lane-strided loads + (k-1) elementwise VPU maximums.
    acc = pad_ref[:, pl.ds(0, L_out, stride=k)]
    for w in range(1, k):
        acc = jnp.maximum(acc, pad_ref[:, pl.ds(w, L_out, stride=k)])
    o_ref[...] = acc


def _pool_direct(x, k):
    """No pre-pass: kernel reads raw rows, pads in VMEM, de-interleaves with
    lane-strided loads.  HBM traffic ~= input + output (the ideal).
    Returns None when a single row is too long for the VMEM budget."""
    N, C, L = x.shape
    _, pad_left, _, L_out = _pool_geometry(L, k)
    Lp = L_out * k
    L_used = min(L, Lp - pad_left)
    NC = N * C
    itemsize = jnp.dtype(x.dtype).itemsize
    align = _sublane_align(x.dtype)

    capacity = _vmem_capacity_bytes()
    tile_budget = int(0.40 * capacity)
    vmem_limit = int(0.80 * capacity)

    # Per-row VMEM: double-buffered input + double-buffered output + padded scratch
    # (+ one extra Lp of headroom for the misaligned-store relayout).
    bytes_per_row = itemsize * (2 * L + 2 * L_out + 2 * Lp)
    tr_budget = tile_budget // max(bytes_per_row, 1)
    if tr_budget < align:
        return None  # rows too long for this formulation; caller falls back
    TR = (tr_budget // align) * align
    if NC > align:
        # keep >= 2 row blocks when possible (v7x: feed both TensorCores)
        TR = min(TR, _round_up((NC + 1) // 2, align))
    TR = max(align, min(TR, _round_up(NC, align)))
    grid = (pl.cdiv(NC, TR),)

    kernel = functools.partial(
        _direct_kernel, k=k, pad_left=pad_left, L_used=L_used, Lp=Lp, L_out=L_out
    )
    out2d = pl.pallas_call(
        kernel,
        out_shape=jax.ShapeDtypeStruct((NC, L_out), x.dtype),
        grid=grid,
        in_specs=[pl.BlockSpec((TR, L), lambda i: (i, 0))],
        out_specs=pl.BlockSpec((TR, L_out), lambda i: (i, 0)),
        scratch_shapes=[pltpu.VMEM((TR, Lp), x.dtype)],
        compiler_params=pltpu.CompilerParams(
            dimension_semantics=("parallel",),
            vmem_limit_bytes=vmem_limit,
        ),
        cost_estimate=pl.CostEstimate(
            flops=int((k - 1) * NC * L_out),
            transcendentals=0,
            bytes_accessed=int(itemsize * (NC * L + NC * L_out)),
        ),
    )(x.reshape(NC, L))
    return out2d.reshape(N, C, L_out)


# ----------------------------------------------------------------------------
# Fallback path: XLA pre-pass de-interleaves to (k, R, C); elementwise max kernel
# ----------------------------------------------------------------------------

def _fallback_kernel(x_ref, o_ref):
    # x_ref: (k, TR, TC) de-interleaved window-element slices; o_ref: (TR, TC).
    k = x_ref.shape[0]
    acc = x_ref[0]
    for i in range(1, k):  # k-1 elementwise VPU maximums (unrolled)
        acc = jnp.maximum(acc, x_ref[i])
    o_ref[...] = acc


def _pick_plane(nc, l_out, align):
    """Lane-dense 2D presentation (R, C) of the flat (nc*l_out) plane.

    The plane is contiguous row-major and the kernel is elementwise across the
    k slices, so any factorization R*C == nc*l_out is valid.  Prefer C a
    multiple of 128 (unmasked full-lane vst), R a multiple of the sublane
    alignment, and C in the 512..2048 sweet spot."""
    m = nc * l_out

    def score(r, c):
        return (
            1 if c % 128 == 0 else 0,
            1 if (r % align == 0 and r >= align) else 0,
            1 if c >= 512 else 0,
            -abs(c - 1024) if c % 128 == 0 else -(10 ** 9),
        )

    best_r, best_c, best_s = nc, l_out, score(nc, l_out)
    c = 128
    while c <= min(m, 16384):
        if m % c == 0:
            r = m // c
            s = score(r, c)
            if s > best_s:
                best_s, best_r, best_c = s, r, c
        c += 128
    return best_r, best_c


def _pool_pre_deinterleaved(x, k):
    """Fallback: one fused XLA pre-pass (pad + trim + de-interleave transpose) feeds a
    purely elementwise max-reduce kernel.  One extra HBM round-trip vs the direct path,
    but uses only constructs Mosaic is guaranteed to lower."""
    N, C, L = x.shape
    _, pad_left, pad_right, L_out = _pool_geometry(L, k)
    NC = N * C
    itemsize = jnp.dtype(x.dtype).itemsize
    align = _sublane_align(x.dtype)

    xp = jnp.pad(x, ((0, 0), (0, 0), (pad_left, pad_right)), constant_values=0)
    xp = xp[..., : L_out * k]
    xr = xp.reshape(NC, L_out, k).transpose(2, 0, 1)  # (k, NC, L_out)

    R, Cw = _pick_plane(NC, L_out, align)
    xr = xr.reshape(k, R, Cw)  # free re-presentation of each plane

    capacity = _vmem_capacity_bytes()
    tile_budget = int(0.40 * capacity)
    vmem_limit = int(0.80 * capacity)

    # Working set ~= (2k input buffers + 2 output buffers) * TR * TC * itemsize.
    TC = Cw if Cw <= 2048 else 2048
    while TC > 128 and itemsize * align * TC * (2 * k + 2) > tile_budget:
        TC = max(128, (TC // 2 // 128) * 128)
    tr_budget = tile_budget // max(itemsize * TC * (2 * k + 2), 1)
    TR = R if R <= tr_budget else max(align, (tr_budget // align) * align)
    if R > align and pl.cdiv(R, TR) == 1 and pl.cdiv(Cw, TC) == 1:
        TR = max(align, min(TR, _round_up((R + 1) // 2, align)))  # 2 blocks for v7x
    grid = (pl.cdiv(R, TR), pl.cdiv(Cw, TC))

    out2d = pl.pallas_call(
        _fallback_kernel,
        out_shape=jax.ShapeDtypeStruct((R, Cw), x.dtype),
        grid=grid,
        in_specs=[pl.BlockSpec((k, TR, TC), lambda i, j: (0, i, j))],
        out_specs=pl.BlockSpec((TR, TC), lambda i, j: (i, j)),
        compiler_params=pltpu.CompilerParams(
            dimension_semantics=("parallel", "parallel"),
            vmem_limit_bytes=vmem_limit,
        ),
        cost_estimate=pl.CostEstimate(
            flops=int((k - 1) * R * Cw),
            transcendentals=0,
            bytes_accessed=int(itemsize * (k + 1) * R * Cw),
        ),
    )(xr)
    return out2d.reshape(N, C, L_out)


# ----------------------------------------------------------------------------
# One-time capability probe + public wrapper
# ----------------------------------------------------------------------------

_DIRECT_PATH_OK = {}


def _direct_path_supported(dtype, k):
    """Lane-strided in-kernel loads are the one construct Mosaic may reject or
    mis-lower, so compile + run the direct kernel once on a toy problem (exercising
    left pad, trailing trim and the misaligned VMEM store) and check it numerically."""
    key = (jnp.dtype(dtype).name, int(k))
    if key not in _DIRECT_PATH_OK:
        ok = False
        try:
            L = 4 * k + 1  # L % k == 1 -> exercises both pad and trailing-zero paths
            base = jnp.arange(2 * 4 * L, dtype=jnp.float32)
            xs = ((base % 13.0) - 6.0).reshape(2, 4, L).astype(dtype)
            got = _pool_direct(xs, k)
            ok = got is not None and bool(
                jnp.allclose(
                    got.astype(jnp.float32),
                    _reference(xs, k).astype(jnp.float32),
                    atol=1e-6,
                    rtol=1e-6,
                )
            )
        except Exception:
            ok = False
        _DIRECT_PATH_OK[key] = ok
    return _DIRECT_PATH_OK[key]


def my_max_pool1d_pad_same(x, kernel_size: int):
    """JAX/Pallas equivalent of MyMaxPool1dPadSame.forward.  x: (N, C, L)."""
    k = int(kernel_size)
    if k <= 1:
        return x  # MaxPool1d(1) with this padding scheme is the identity
    if _direct_path_supported(x.dtype, k):
        out = _pool_direct(x, k)
        if out is not None:
            return out
    return _pool_pre_deinterleaved(x, k)


# ----------------------------------------------------------------------------
# Self-test
# ----------------------------------------------------------------------------

if __name__ == "__main__":
    key = jax.random.PRNGKey(0)

    # Primary small case implied by the module: (N, C, L) = (2, 4, 16), k = 3.
    N, C, L = 2, 4, 16
    kernel_size = 3
    x = jax.random.normal(key, (N, C, L), dtype=jnp.float32)

    fn = jax.jit(functools.partial(my_max_pool1d_pad_same, kernel_size=kernel_size))
    out = jax.block_until_ready(fn(x))
    ref = _reference(x, kernel_size)
    assert out.shape == ref.shape, (out.shape, ref.shape)
    assert jnp.allclose(out, ref), "mismatch vs reference (small case)"

    # The fallback (pre-de-interleaved) path must also stay healthy, since the auto
    # wrapper selects it on toolchains/generations without lane-strided loads.
    out_fb = jax.block_until_ready(
        jax.jit(functools.partial(_pool_pre_deinterleaved, k=kernel_size))(x)
    )
    assert out_fb.shape == ref.shape, (out_fb.shape, ref.shape)
    assert jnp.allclose(out_fb, ref), "mismatch vs reference (fallback path)"

    # Extra checks exercising tiled grids / partial edge blocks, trailing-window drop,
    # zero-pad edge columns, and pad_left == 0 (still tiny / fast).
    for (n2, c2, l2, k2), subkey in zip(
        [(2, 4, 2998, 3), (8, 8, 47, 5), (2, 4, 16, 2)], jax.random.split(key, 3)
    ):
        x2 = jax.random.normal(subkey, (n2, c2, l2), dtype=jnp.float32)
        fn2 = jax.jit(functools.partial(my_max_pool1d_pad_same, kernel_size=k2))
        out2 = jax.block_until_ready(fn2(x2))
        ref2 = _reference(x2, k2)
        assert out2.shape == ref2.shape, (out2.shape, ref2.shape)
        assert jnp.allclose(out2, ref2), f"mismatch vs reference for {(n2, c2, l2, k2)}"

    print("KERNEL_OK")
</pallas_src>

<mosaic_0001>
module attributes {stable_mosaic.version = 11 : i64} {
  func.func @_fallback_kernel(%arg0: i32, %arg1: i32, %arg2: memref<3x8x6xf32, #tpu.memory_space<vmem>>, %arg3: memref<8x6xf32, #tpu.memory_space<vmem>>) attributes {dimension_semantics = [#tpu.dimension_semantics<parallel>, #tpu.dimension_semantics<parallel>], iteration_bounds = array<i64: 1, 1>, scalar_prefetch = 0 : i64, scratch_operands = 0 : i64, tpu.core_type = #tpu.core_type<tc>, window_params = [{transform_indices = @transform_0, window_bounds = array<i64: 3, 8, 6>}, {transform_indices = @transform_1, window_bounds = array<i64: 8, 6>}]} {
    %c0 = arith.constant 0 : index
    %c0_0 = arith.constant 0 : index
    %c0_1 = arith.constant 0 : index
    %0 = vector.load %arg2[%c0, %c0_0, %c0_1] : memref<3x8x6xf32, #tpu.memory_space<vmem>>, vector<1x8x6xf32>
    %1 = vector.shape_cast %0 : vector<1x8x6xf32> to vector<8x6xf32>
    %c1 = arith.constant 1 : index
    %c0_2 = arith.constant 0 : index
    %c0_3 = arith.constant 0 : index
    %2 = vector.load %arg2[%c1, %c0_2, %c0_3] : memref<3x8x6xf32, #tpu.memory_space<vmem>>, vector<1x8x6xf32>
    %3 = vector.shape_cast %2 : vector<1x8x6xf32> to vector<8x6xf32>
    %4 = arith.maximumf %1, %3 : vector<8x6xf32>
    %c2 = arith.constant 2 : index
    %c0_4 = arith.constant 0 : index
    %c0_5 = arith.constant 0 : index
    %5 = vector.load %arg2[%c2, %c0_4, %c0_5] : memref<3x8x6xf32, #tpu.memory_space<vmem>>, vector<1x8x6xf32>
    %6 = vector.shape_cast %5 : vector<1x8x6xf32> to vector<8x6xf32>
    %7 = arith.maximumf %4, %6 : vector<8x6xf32>
    %c0_6 = arith.constant 0 : index
    %c0_7 = arith.constant 0 : index
    %8 = vector.load %arg3[%c0_6, %c0_7] : memref<8x6xf32, #tpu.memory_space<vmem>>, vector<8x6xf32>
    tpu.vector_store %arg3[%c0_6, %c0_7], %7 {strides = array<i32>} : memref<8x6xf32, #tpu.memory_space<vmem>>, vector<8x6xf32>,
    return
  }
  func.func @transform_0(%arg0: i32, %arg1: i32) -> (i32, i32, i32) {
    %c0_i32 = arith.constant 0 : i32
    %c0_i32_0 = arith.constant 0 : i32
    return %c0_i32, %arg0, %arg1 : i32, i32, i32
  }
  func.func @transform_1(%arg0: i32, %arg1: i32) -> (i32, i32) {
    %c0_i32 = arith.constant 0 : i32
    return %arg0, %arg1 : i32, i32
  }
}

</mosaic_0001>

<llo_original>
// kernel: my_max_pool1d_pad_same.1
$region0: #{my_max_pool1d_pad_same.1}
  #allocation0 [shape = 'u32[]', space=smem, size = 0x4, offset = 0x4, fixed_abs, tag = 'smem constant byte address 0x4 - core index']
  #allocation1 [shape = 'u32[144,128]{1,0:T(1,128)}', space=vmem, size = 0x12000, scoped, tag = 'internal scratch']
  %s0 = inlined_call_operand.vmem [shape: f32[3,8,6], index: 0, kind: input, shape index: {}]
  %s1 = inlined_call_operand.hbm [shape: f32[8,6], index: 1, kind: output, shape index: {}]
  %s2 = sld [smem:[#allocation0]]
  $region14: #{my_max_pool1d_pad_same.1} parent=0
    _
  %s4 = ssub.s32 1, %s2
  %s5 = scalar_select 0, %s4, %s2
  $region1: #{my_max_pool1d_pad_same.1} parent=0
    #allocation2 [shape = 'u8[4096]{0}', space=vmem, size = 0x1000, scoped, tag = 'output window, operand 0, single buffered']
    #allocation3 [shape = 's32[1]{0}', space=sflag, size = 0x4, scoped, tag = 'scoped memory for my_max_pool1d_pad_same.1']
    %6 = vsyncpa [#allocation3], 0
    // Predicated region
    $region2: #{my_max_pool1d_pad_same.1} parent=1 // pred_check
      _
    $region3: #{my_max_pool1d_pad_same.1} parent=1 // pred_check_branch
      %8 = sbr.rel (0) target = $region5
    $region4: #{my_max_pool1d_pad_same.1} parent=1 // pred_region
      _
    $region5: #{my_max_pool1d_pad_same.1} parent=1 // pred_fallthru
      _
    %v9 = vld [vmem:[%s0] sm:$0xff]
    %s10 = scalar_lea.vmem %s0, 8
    %v11 = vld [vmem:[%s10] sm:$0xff]
    %v12 = vmax.f32 %v9, %v11
    %s13 = scalar_lea.vmem %s0, 16
    %v14 = vld [vmem:[%s13] sm:$0xff]
    %v15 = vmax.f32 %v12, %v14
    %vm16 = vcmask 48128
    %17 = vst.msk [vmem:[#allocation2] sm:$0xff] %vm16, %v15
    // Predicated region
    $region6: #{my_max_pool1d_pad_same.1} parent=1 // pred_check
      _
    $region7: #{my_max_pool1d_pad_same.1} parent=1 // pred_check_branch
      %19 = sbr.rel (0) target = $region9
    $region8: #{my_max_pool1d_pad_same.1} parent=1 // pred_region
      %s21 = ssub.s32 128, 128
      %22 = vsyncadd [#allocation3], %s21
      %s24 = sshll.u32 [#allocation2], 4
      %s25 = int_to_ptr.vmem [resolvable:$true] %s24
      %27 = dma.vmem_to_hbm [thread:$0]  %s25, 128, %s1, [#allocation3]
    $region9: #{my_max_pool1d_pad_same.1} parent=1 // pred_fallthru
      _
    // Predicated region
    $region10: #{my_max_pool1d_pad_same.1} parent=1 // pred_check
      _
    $region11: #{my_max_pool1d_pad_same.1} parent=1 // pred_check_branch
      %29 = sbr.rel (0) target = $region13
    $region12: #{my_max_pool1d_pad_same.1} parent=1 // pred_region
      %30 = dma.done [#allocation3], 128
    $region13: #{my_max_pool1d_pad_same.1} parent=1 // pred_fallthru
      _
    %31 = vsyncpa [#allocation3], 1

</llo_original>
